<compile_context>
chip_gen: v5e
topology: v5e:2x2
jax: 0.10.0
libtpu: 0.0.40
codegen_flags: <defaults>
</compile_context>

<pallas_src>
import jax
import jax.numpy as jnp
from jax.experimental import pallas as pl
from jax.experimental.pallas import tpu as pltpu
import numpy as np


def _round_up(x, m):
    return ((x + m - 1) // m) * m


def _embedding_kernel(labels_ref, table_ref, o_ref):
    # labels_ref: (bb, 1) int32    table_ref: (num_labels_padded, H) f32
    labels = labels_ref[...]                                   # (bb, 1)
    bb = labels.shape[0]
    nl = table_ref.shape[0]
    # One-hot row selector on the VPU, then one MXU matmul gathers the whole tile:
    # row i of the output = table[labels[i]].
    iota = jax.lax.broadcasted_iota(jnp.int32, (bb, nl), 1)    # lane-dim iota
    one_hot = (labels == iota).astype(table_ref.dtype)         # (bb, nl)
    gathered = jnp.dot(one_hot, table_ref[...],
                       preferred_element_type=jnp.float32)     # (bb, H)
    o_ref[...] = gathered.astype(o_ref.dtype)


def label_embedding_forward(labels, table, *, block_b=1024, force_pallas=False):
    """Pallas TPU forward of LabelEmbeddingModule: out[..., :] = table[labels[...]]."""
    orig_shape = labels.shape
    labels_flat = labels.reshape(-1).astype(jnp.int32)
    B = labels_flat.shape[0]
    N, H = table.shape
    assert H % 128 == 0, "hidden_dim must be a multiple of 128 for lane-dense stores"

    # Small-batch fallback: a 6x768 gather is handled at roofline by XLA already;
    # the pallas_call launch + pipeline prologue would dominate at these sizes.
    if (not force_pallas) and B * H * table.dtype.itemsize < (2 << 20):
        return table[labels_flat].reshape(*orig_shape, H)

    # Pad table rows to a multiple of 8 (sublane alignment); padding rows are zero.
    Np = max(8, _round_up(N, 8))
    if Np != N:
        table = jnp.pad(table, ((0, Np - N), (0, 0)))

    # Batch tile: large to amortize per-step overhead, multiple of 8 sublanes,
    # never larger than the (rounded-up) batch itself.  Ragged last block is
    # handled by Pallas (OOB writes masked, garbage tail labels discarded), so
    # no wrapper-side padding or output slice is needed.
    bb = _round_up(min(block_b, _round_up(B, 8)), 8)
    grid = (pl.cdiv(B, bb),)

    labels2d = labels_flat.reshape(B, 1)

    out = pl.pallas_call(
        _embedding_kernel,
        out_shape=jax.ShapeDtypeStruct((B, H), table.dtype),
        grid_spec=pltpu.PrefetchScalarGridSpec(
            num_scalar_prefetch=0,
            grid=grid,
            in_specs=[
                pl.BlockSpec((bb, 1), lambda i: (i, 0)),       # labels tile
                pl.BlockSpec((Np, H), lambda i: (0, 0)),       # full table, VMEM-resident
            ],
            out_specs=pl.BlockSpec((bb, H), lambda i: (i, 0)),
        ),
        compiler_params=pltpu.CompilerParams(
            dimension_semantics=("parallel",)),
    )(labels2d, table)

    return out.reshape(*orig_shape, H)


def reference_forward(labels, table):
    """Pure-JAX reference (matches nn.Embedding lookup)."""
    return table[labels]


if __name__ == "__main__":
    NUM_LABELS, HIDDEN = 6, 768   # module defaults

    key = jax.random.PRNGKey(0)
    k_t, k_l1, k_l2 = jax.random.split(key, 3)
    table = jax.random.normal(k_t, (NUM_LABELS, HIDDEN), jnp.float32)

    # 1) Small batch, forced through the Pallas kernel (exercise the kernel itself).
    B_small = 16
    labels_small = jax.random.randint(k_l1, (B_small,), 0, NUM_LABELS, jnp.int32)
    out_small = jax.block_until_ready(
        label_embedding_forward(labels_small, table, force_pallas=True))
    np.testing.assert_allclose(np.asarray(out_small),
                               np.asarray(reference_forward(labels_small, table)),
                               rtol=1e-6, atol=1e-6)
    assert out_small.shape == (B_small, HIDDEN)

    # 2) Same small batch through the default path (XLA-gather fallback).
    out_fb = jax.block_until_ready(label_embedding_forward(labels_small, table))
    np.testing.assert_allclose(np.asarray(out_fb), np.asarray(out_small),
                               rtol=1e-6, atol=1e-6)

    # 3) Larger, ragged batch (grid of 2, partial last block masked by Pallas).
    B_big = 1040
    labels_big = jax.random.randint(k_l2, (B_big,), 0, NUM_LABELS, jnp.int32)
    out_big = jax.block_until_ready(label_embedding_forward(labels_big, table))
    np.testing.assert_allclose(np.asarray(out_big),
                               np.asarray(reference_forward(labels_big, table)),
                               rtol=1e-6, atol=1e-6)
    assert out_big.shape == (B_big, HIDDEN)

    print("KERNEL_OK")
</pallas_src>

<mosaic_0001>
module attributes {stable_mosaic.version = 11 : i64} {
  func.func @_embedding_kernel(%arg0: i32, %arg1: memref<16x1xi32, #tpu.memory_space<vmem>>, %arg2: memref<8x768xf32, #tpu.memory_space<vmem>>, %arg3: memref<16x768xf32, #tpu.memory_space<vmem>>) attributes {dimension_semantics = [#tpu.dimension_semantics<parallel>], iteration_bounds = array<i64: 1>, scalar_prefetch = 0 : i64, scratch_operands = 0 : i64, tpu.core_type = #tpu.core_type<tc>, window_params = [{transform_indices = @transform_0, window_bounds = array<i64: 16, 1>}, {pipeline_mode = #tpu.pipeline_mode<synchronous>, transform_indices = @transform_1, window_bounds = array<i64: 8, 768>}, {transform_indices = @transform_2, window_bounds = array<i64: 16, 768>}]} {
    %c0 = arith.constant 0 : index
    %c0_0 = arith.constant 0 : index
    %0 = vector.load %arg1[%c0, %c0_0] : memref<16x1xi32, #tpu.memory_space<vmem>>, vector<16x1xi32>
    %1 = tpu.iota {dimensions = array<i32: 1>} : vector<16x8xi32>
    %2 = vector.broadcast %0 : vector<16x1xi32> to vector<16x8xi32>
    %3 = arith.cmpi eq, %2, %1 : vector<16x8xi32>
    %4 = arith.extui %3 : vector<16x8xi1> to vector<16x8xi32>
    %5 = arith.sitofp %4 : vector<16x8xi32> to vector<16x8xf32>
    %c0_1 = arith.constant 0 : index
    %c0_2 = arith.constant 0 : index
    %6 = vector.load %arg2[%c0_1, %c0_2] : memref<8x768xf32, #tpu.memory_space<vmem>>, vector<8x768xf32>
    %cst = arith.constant dense<0.000000e+00> : vector<16x768xf32>
    %7 = tpu.matmul %5, %6, %cst {dimension_numbers = #tpu.dot_dimension_numbers<[1], [0], [0], [1], [0, 0, 1, 1], [], []>} : vector<16x8xf32>, vector<8x768xf32>, vector<16x768xf32> -> vector<16x768xf32>
    %c0_3 = arith.constant 0 : index
    %c0_4 = arith.constant 0 : index
    %8 = vector.load %arg3[%c0_3, %c0_4] : memref<16x768xf32, #tpu.memory_space<vmem>>, vector<16x768xf32>
    tpu.vector_store %arg3[%c0_3, %c0_4], %7 {strides = array<i32>} : memref<16x768xf32, #tpu.memory_space<vmem>>, vector<16x768xf32>,
    return
  }
  func.func @transform_0(%arg0: i32) -> (i32, i32) {
    %c0_i32 = arith.constant 0 : i32
    %c0_i32_0 = arith.constant 0 : i32
    return %arg0, %c0_i32 : i32, i32
  }
  func.func @transform_1(%arg0: i32) -> (i32, i32) {
    %c0_i32 = arith.constant 0 : i32
    %c0_i32_0 = arith.constant 0 : i32
    %c0_i32_1 = arith.constant 0 : i32
    return %c0_i32, %c0_i32_0 : i32, i32
  }
  func.func @transform_2(%arg0: i32) -> (i32, i32) {
    %c0_i32 = arith.constant 0 : i32
    %c0_i32_0 = arith.constant 0 : i32
    return %arg0, %c0_i32 : i32, i32
  }
}

</mosaic_0001>

<llo_original>
// kernel: tpu_custom_call.1
$region0: #{tpu_custom_call.1}
  #allocation0 [shape = 'u32[]', space=smem, size = 0x4, offset = 0x4, fixed_abs, tag = 'smem constant byte address 0x4 - core index']
  #allocation1 [shape = 'u32[72,128]{1,0:T(1,128)}', space=vmem, size = 0x9000, scoped, tag = 'internal scratch']
  %s0 = inlined_call_operand.vmem [shape: s32[16,1], index: 0, kind: input, shape index: {}]
  %s1 = inlined_call_operand.hbm [shape: f32[8,768], index: 1, kind: input, shape index: {}]
  %s2 = inlined_call_operand.hbm [shape: f32[16,768], index: 2, kind: output, shape index: {}]
  %s3 = sld [smem:[#allocation0]]
  $region22: #{tpu_custom_call.1} parent=0
    _
  %s5 = ssub.s32 1, %s3
  %s6 = scalar_select 0, %s5, %s3
  $region1: #{tpu_custom_call.1} parent=0
    #allocation2 [shape = 'u8[24576]{0}', space=vmem, size = 0x6000, scoped, tag = 'input window, operand 1, single buffered']
    #allocation3 [shape = 's32[1]{0}', space=sflag, size = 0x4, scoped, tag = 'scoped memory for tpu_custom_call.1']
    #allocation4 [shape = 's32[1]{0}', space=sflag, size = 0x4, scoped, tag = 'scoped memory for tpu_custom_call.1']
    #allocation5 [shape = 'u8[49152]{0}', space=vmem, size = 0xc000, scoped, tag = 'output window, operand 0, single buffered']
    %7 = vsyncpa [#allocation3], 0
    %8 = vsyncpa [#allocation4], 0
    // Predicated region
    $region2: #{tpu_custom_call.1} parent=1 // pred_check
      _
    $region3: #{tpu_custom_call.1} parent=1 // pred_check_branch
      %10 = sbr.rel (0) target = $region5
    $region4: #{tpu_custom_call.1} parent=1 // pred_region
      _
    $region5: #{tpu_custom_call.1} parent=1 // pred_fallthru
      _
    // Predicated region
    $region6: #{tpu_custom_call.1} parent=1 // pred_check
      _
    $region7: #{tpu_custom_call.1} parent=1 // pred_check_branch
      %12 = sbr.rel (0) target = $region9
    $region8: #{tpu_custom_call.1} parent=1 // pred_region
      %14 = vsyncadd [#allocation3], 0
      %s16 = sshll.u32 %s1, 4
      %s17 = int_to_ptr.hbm [resolvable:$true] %s16
      %s18 = sshll.u32 [#allocation2], 4
      %s19 = int_to_ptr.vmem [resolvable:$true] %s18
      %21 = dma.hbm_to_vmem [thread:$0]  %s17, 768, %s19, [#allocation3]
    $region9: #{tpu_custom_call.1} parent=1 // pred_fallthru
      _
    // Predicated region
    $region10: #{tpu_custom_call.1} parent=1 // pred_check
      _
    $region11: #{tpu_custom_call.1} parent=1 // pred_check_branch
      %23 = sbr.rel (0) target = $region13
    $region12: #{tpu_custom_call.1} parent=1 // pred_region
      %25 = dma.done [#allocation3], 768
    $region13: #{tpu_custom_call.1} parent=1 // pred_fallthru
      _
    %v26 = vld [vmem:[%s0] sm:$0xff]
    %v27 = vld [vmem:[%s0 + $0x8] sm:$0xff]
    %v28 = vlaneseq
    %v29 = vand.u32 %v28, 127
    %30 = vset.pattern.permute.xlu0 0
    %31 = vperm.xlu0 %30, %v26
    %v32 = vpop.permute.xlu0 %31
    %33 = vset.pattern.permute.xlu0 0
    %34 = vperm.xlu0 %33, %v27
    %v35 = vpop.permute.xlu0 %34
    %vm36 = vcmp.eq.s32.totalorder %v32, %v29
    %vm37 = vcmp.eq.s32.totalorder %v35, %v29
    %v38 = vsel %vm36, 1, 0
    %v39 = vsel %vm37, 1, 0
    %v40 = vcvt.s32.f32 %v38
    %v41 = vcvt.s32.f32 %v39
    %v42 = vld [vmem:[#allocation2] sm:$0xff]
    %v43 = vld [vmem:[#allocation2 + $0x8] sm:$0xff]
    %v44 = vld [vmem:[#allocation2 + $0x10] sm:$0xff]
    %v45 = vld [vmem:[#allocation2 + $0x18] sm:$0xff]
    %v46 = vld [vmem:[#allocation2 + $0x20] sm:$0xff]
    %v47 = vld [vmem:[#allocation2 + $0x28] sm:$0xff]
    %vm48 = vcmask 64512
    %v50 = vsel %vm48, %v40, 0
    %v53 = vsel %vm48, %v41, 0
    %55 = vmatpush.msra.mxu0 0.0
    %56 = vmatpush.msra.mxu0 0.0
    %57 = vmatpush.msra.mxu0 0.0
    %58 = vmatpush.msra.mxu0 0.0
    %59 = vmatpush.msra.mxu0 0.0
    %60 = vmatpush.msra.mxu0 0.0
    %61 = vmatpush.msra.mxu0 0.0
    %62 = vmatpush.msra.mxu0 0.0
    %63 = vmatpush.msra.mxu0 0.0
    %64 = vmatpush.msra.mxu0 0.0
    %65 = vmatpush.msra.mxu0 0.0
    %66 = vmatpush.msra.mxu0 0.0
    %67 = vmatpush.msra.mxu0 0.0
    %68 = vmatpush.msra.mxu0 0.0
    %69 = vmatpush.msra.mxu0 0.0
    %70 = vmatpush.msra.mxu0 %v42
    %71 = vmatmul.f32.gmra.mxu0 %v50
    %v72 = vpop.f32.mrf.mxu0
    %v73 = vadd.f32 0.0, %v72
    %74 = vmatmul.f32.gmra.mxu0 %v53
    %v75 = vpop.f32.mrf.mxu0
    %v76 = vadd.f32 0.0, %v75
    %77 = vdwg.mxu0
    %78 = vmatpush.msra.mxu0 0.0
    %79 = vmatpush.msra.mxu0 0.0
    %80 = vmatpush.msra.mxu0 0.0
    %81 = vmatpush.msra.mxu0 0.0
    %82 = vmatpush.msra.mxu0 0.0
    %83 = vmatpush.msra.mxu0 0.0
    %84 = vmatpush.msra.mxu0 0.0
    %85 = vmatpush.msra.mxu0 0.0
    %86 = vmatpush.msra.mxu0 0.0
    %87 = vmatpush.msra.mxu0 0.0
    %88 = vmatpush.msra.mxu0 0.0
    %89 = vmatpush.msra.mxu0 0.0
    %90 = vmatpush.msra.mxu0 0.0
    %91 = vmatpush.msra.mxu0 0.0
    %92 = vmatpush.msra.mxu0 0.0
    %93 = vmatpush.msra.mxu0 %v43
    %94 = vmatmul.f32.gmra.mxu0 %v50
    %v95 = vpop.f32.mrf.mxu0
    %v96 = vadd.f32 0.0, %v95
    %97 = vmatmul.f32.gmra.mxu0 %v53
    %v98 = vpop.f32.mrf.mxu0
    %v99 = vadd.f32 0.0, %v98
    %100 = vdwg.mxu0
    %101 = vmatpush.msra.mxu0 0.0
    %102 = vmatpush.msra.mxu0 0.0
    %103 = vmatpush.msra.mxu0 0.0
    %104 = vmatpush.msra.mxu0 0.0
    %105 = vmatpush.msra.mxu0 0.0
    %106 = vmatpush.msra.mxu0 0.0
    %107 = vmatpush.msra.mxu0 0.0
    %108 = vmatpush.msra.mxu0 0.0
    %109 = vmatpush.msra.mxu0 0.0
    %110 = vmatpush.msra.mxu0 0.0
    %111 = vmatpush.msra.mxu0 0.0
    %112 = vmatpush.msra.mxu0 0.0
    %113 = vmatpush.msra.mxu0 0.0
    %114 = vmatpush.msra.mxu0 0.0
    %115 = vmatpush.msra.mxu0 0.0
    %116 = vmatpush.msra.mxu0 %v44
    %117 = vmatmul.f32.gmra.mxu0 %v50
    %v118 = vpop.f32.mrf.mxu0
    %v119 = vadd.f32 0.0, %v118
    %120 = vmatmul.f32.gmra.mxu0 %v53
    %v121 = vpop.f32.mrf.mxu0
    %v122 = vadd.f32 0.0, %v121
    %123 = vdwg.mxu0
    %124 = vmatpush.msra.mxu0 0.0
    %125 = vmatpush.msra.mxu0 0.0
    %126 = vmatpush.msra.mxu0 0.0
    %127 = vmatpush.msra.mxu0 0.0
    %128 = vmatpush.msra.mxu0 0.0
    %129 = vmatpush.msra.mxu0 0.0
    %130 = vmatpush.msra.mxu0 0.0
    %131 = vmatpush.msra.mxu0 0.0
    %132 = vmatpush.msra.mxu0 0.0
    %133 = vmatpush.msra.mxu0 0.0
    %134 = vmatpush.msra.mxu0 0.0
    %135 = vmatpush.msra.mxu0 0.0
    %136 = vmatpush.msra.mxu0 0.0
    %137 = vmatpush.msra.mxu0 0.0
    %138 = vmatpush.msra.mxu0 0.0
    %139 = vmatpush.msra.mxu0 %v45
    %140 = vmatmul.f32.gmra.mxu0 %v50
    %v141 = vpop.f32.mrf.mxu0
    %v142 = vadd.f32 0.0, %v141
    %143 = vmatmul.f32.gmra.mxu0 %v53
    %v144 = vpop.f32.mrf.mxu0
    %v145 = vadd.f32 0.0, %v144
    %146 = vdwg.mxu0
    %147 = vmatpush.msra.mxu0 0.0
    %148 = vmatpush.msra.mxu0 0.0
    %149 = vmatpush.msra.mxu0 0.0
    %150 = vmatpush.msra.mxu0 0.0
    %151 = vmatpush.msra.mxu0 0.0
    %152 = vmatpush.msra.mxu0 0.0
    %153 = vmatpush.msra.mxu0 0.0
    %154 = vmatpush.msra.mxu0 0.0
    %155 = vmatpush.msra.mxu0 0.0
    %156 = vmatpush.msra.mxu0 0.0
    %157 = vmatpush.msra.mxu0 0.0
    %158 = vmatpush.msra.mxu0 0.0
    %159 = vmatpush.msra.mxu0 0.0
    %160 = vmatpush.msra.mxu0 0.0
    %161 = vmatpush.msra.mxu0 0.0
    %162 = vmatpush.msra.mxu0 %v46
    %163 = vmatmul.f32.gmra.mxu0 %v50
    %v164 = vpop.f32.mrf.mxu0
    %v165 = vadd.f32 0.0, %v164
    %166 = vmatmul.f32.gmra.mxu0 %v53
    %v167 = vpop.f32.mrf.mxu0
    %v168 = vadd.f32 0.0, %v167
    %169 = vdwg.mxu0
    %170 = vmatpush.msra.mxu0 0.0
    %171 = vmatpush.msra.mxu0 0.0
    %172 = vmatpush.msra.mxu0 0.0
    %173 = vmatpush.msra.mxu0 0.0
    %174 = vmatpush.msra.mxu0 0.0
    %175 = vmatpush.msra.mxu0 0.0
    %176 = vmatpush.msra.mxu0 0.0
    %177 = vmatpush.msra.mxu0 0.0
    %178 = vmatpush.msra.mxu0 0.0
    %179 = vmatpush.msra.mxu0 0.0
    %180 = vmatpush.msra.mxu0 0.0
    %181 = vmatpush.msra.mxu0 0.0
    %182 = vmatpush.msra.mxu0 0.0
    %183 = vmatpush.msra.mxu0 0.0
    %184 = vmatpush.msra.mxu0 0.0
    %185 = vmatpush.msra.mxu0 %v47
    %186 = vmatmul.f32.gmra.mxu0 %v50
    %v187 = vpop.f32.mrf.mxu0
    %v188 = vadd.f32 0.0, %v187
    %189 = vmatmul.f32.gmra.mxu0 %v53
    %v190 = vpop.f32.mrf.mxu0
    %v191 = vadd.f32 0.0, %v190
    %192 = vdwg.mxu0
    %193 = vst [vmem:[#allocation5] sm:$0xff] %v73
    %194 = vst [vmem:[#allocation5 + $0x8] sm:$0xff] %v96
    %195 = vst [vmem:[#allocation5 + $0x10] sm:$0xff] %v119
    %196 = vst [vmem:[#allocation5 + $0x18] sm:$0xff] %v142
    %197 = vst [vmem:[#allocation5 + $0x20] sm:$0xff] %v165
    %198 = vst [vmem:[#allocation5 + $0x28] sm:$0xff] %v188
    %199 = vst [vmem:[#allocation5 + $0x30] sm:$0xff] %v76
    %200 = vst [vmem:[#allocation5 + $0x38] sm:$0xff] %v99
    %201 = vst [vmem:[#allocation5 + $0x40] sm:$0xff] %v122
    %202 = vst [vmem:[#allocation5 + $0x48] sm:$0xff] %v145
    %203 = vst [vmem:[#allocation5 + $0x50] sm:$0xff] %v168
    %204 = vst [vmem:[#allocation5 + $0x58] sm:$0xff] %v191
    // Predicated region
    $region14: #{tpu_custom_call.1} parent=1 // pred_check
      _
    $region15: #{tpu_custom_call.1} parent=1 // pred_check_branch
      %206 = sbr.rel (0) target = $region17
    $region16: #{tpu_custom_call.1} parent=1 // pred_region
      %208 = vsyncadd [#allocation4], 0
      %s209 = sshll.u32 [#allocation5], 4
      %s210 = int_to_ptr.vmem [resolvable:$true] %s209
      %s211 = sshll.u32 %s2, 4
      %s212 = int_to_ptr.hbm [resolvable:$true] %s211
      %217 = dma.vmem_to_hbm [thread:$0]  %s210, 1536, %s212, [#allocation4], 768, 768, 48
    $region17: #{tpu_custom_call.1} parent=1 // pred_fallthru
      _
    // Predicated region
    $region18: #{tpu_custom_call.1} parent=1 // pred_check
      _
    $region19: #{tpu_custom_call.1} parent=1 // pred_check_branch
      %219 = sbr.rel (0) target = $region21
    $region20: #{tpu_custom_call.1} parent=1 // pred_region
      %221 = dma.done [#allocation4], 1536
    $region21: #{tpu_custom_call.1} parent=1 // pred_fallthru
      _
    %222 = vsyncpa [#allocation3], 1
    %223 = vsyncpa [#allocation4], 1

</llo_original>
